<compile_context>
chip_gen: v7x
topology: tpu7x:2x2x1
jax: 0.10.0
libtpu: 0.0.40
codegen_flags: <defaults>
</compile_context>

<pallas_src>
import functools

import jax
import jax.numpy as jnp
from jax.experimental import pallas as pl
from jax.experimental.pallas import tpu as pltpu

_LANES = 128
_SUBLANES = 8
_MAX_TILE_ROWS = 4096  # 4096 x 128 x 4 B = 2 MiB per f32 block (fits all gens)


def _gaussian_dropout_kernel(x_ref, noise_ref, o_ref, *, alpha):
    noise = noise_ref[...]
    eps = noise * jnp.asarray(alpha, noise.dtype) + jnp.asarray(1.0, noise.dtype)
    o_ref[...] = (x_ref[...] * eps).astype(o_ref.dtype)


def gaussian_dropout(x, *, drop_p, key, training=True):
    """Gaussian dropout: x * (N(0,1)*alpha + 1), alpha = p/(1-p)."""
    if drop_p < 1.0:
        alpha = drop_p / (1.0 - drop_p)
    else:
        alpha = 0.0

    if not training:
        return x

    orig_shape = x.shape
    orig_dtype = x.dtype

    # Noise matches the reference torch.randn(x.size()).  Use bf16 noise for
    # bf16 inputs (halves HBM traffic / VPU work on v6e/v7x), f32 otherwise.
    noise_dtype = jnp.bfloat16 if orig_dtype == jnp.bfloat16 else jnp.float32
    noise = jax.random.normal(key, orig_shape, dtype=noise_dtype)

    # Flatten to a lane-dense 2-D slab [rows, 128], rows padded to a sublane
    # multiple and to a multiple of the row-tile so the grid divides evenly.
    n = 1
    for d in orig_shape:
        n *= d
    rows = -(-n // _LANES)
    rows = -(-rows // _SUBLANES) * _SUBLANES
    tile_rows = min(rows, _MAX_TILE_ROWS)
    rows = -(-rows // tile_rows) * tile_rows
    n_pad = rows * _LANES

    flat_x = x.reshape(-1)
    flat_n = noise.reshape(-1)
    if n_pad != n:  # static branch: no pad copies when already tile-aligned
        flat_x = jnp.pad(flat_x, (0, n_pad - n))
        flat_n = jnp.pad(flat_n, (0, n_pad - n))
    x2d = flat_x.reshape(rows, _LANES)
    n2d = flat_n.reshape(rows, _LANES)

    grid = (rows // tile_rows,)
    block = pl.BlockSpec((tile_rows, _LANES), lambda i: (i, 0))

    out2d = pl.pallas_call(
        functools.partial(_gaussian_dropout_kernel, alpha=alpha),
        out_shape=jax.ShapeDtypeStruct((rows, _LANES), orig_dtype),
        grid=grid,
        in_specs=[block, block],
        out_specs=block,
        compiler_params=pltpu.CompilerParams(
            dimension_semantics=("parallel",),
        ),
    )(x2d, n2d)

    if n_pad != n:
        return out2d.reshape(-1)[:n].reshape(orig_shape)
    return out2d.reshape(orig_shape)


if __name__ == "__main__":
    key = jax.random.PRNGKey(0)
    kx, knoise = jax.random.split(key)

    # Small NCHW activation consistent with the module's conv-style usage.
    x = jax.random.normal(kx, (2, 4, 16, 16), dtype=jnp.float32)

    drop_p = 0.3  # module args layers_size / l are unused in forward
    y = gaussian_dropout(x, drop_p=drop_p, key=knoise, training=True)
    y = jax.block_until_ready(y)

    # Reference (pure JAX) check: same key/shape/dtype => identical noise.
    alpha = drop_p / (1.0 - drop_p)
    eps_ref = jax.random.normal(knoise, x.shape, dtype=jnp.float32) * alpha + 1.0
    y_ref = x * eps_ref

    assert y.shape == x.shape
    assert y.dtype == x.dtype
    assert bool(jnp.all(jnp.isfinite(y)))
    assert not bool(jnp.allclose(y, x))          # noise was applied
    assert bool(jnp.allclose(y, y_ref, atol=1e-6, rtol=1e-6))

    print("KERNEL_OK")
</pallas_src>

<mosaic_0001>
module attributes {stable_mosaic.version = 11 : i64} {
  func.func @_gaussian_dropout_kernel(%arg0: i32, %arg1: memref<16x128xf32, #tpu.memory_space<vmem>>, %arg2: memref<16x128xf32, #tpu.memory_space<vmem>>, %arg3: memref<16x128xf32, #tpu.memory_space<vmem>>) attributes {dimension_semantics = [#tpu.dimension_semantics<parallel>], iteration_bounds = array<i64: 1>, scalar_prefetch = 0 : i64, scratch_operands = 0 : i64, tpu.core_type = #tpu.core_type<tc>, window_params = [{transform_indices = @transform_0, window_bounds = array<i64: 16, 128>}, {transform_indices = @transform_1, window_bounds = array<i64: 16, 128>}, {transform_indices = @transform_2, window_bounds = array<i64: 16, 128>}]} {
    %c0 = arith.constant 0 : index
    %c0_0 = arith.constant 0 : index
    %0 = vector.load %arg2[%c0, %c0_0] : memref<16x128xf32, #tpu.memory_space<vmem>>, vector<16x128xf32>
    %cst = arith.constant 0.428571433 : f32
    %1 = vector.broadcast %cst : f32 to vector<16x128xf32>
    %2 = arith.mulf %0, %1 : vector<16x128xf32>
    %cst_1 = arith.constant 1.000000e+00 : f32
    %3 = vector.broadcast %cst_1 : f32 to vector<16x128xf32>
    %4 = arith.addf %2, %3 : vector<16x128xf32>
    %c0_2 = arith.constant 0 : index
    %c0_3 = arith.constant 0 : index
    %5 = vector.load %arg1[%c0_2, %c0_3] : memref<16x128xf32, #tpu.memory_space<vmem>>, vector<16x128xf32>
    %6 = arith.mulf %5, %4 : vector<16x128xf32>
    %c0_4 = arith.constant 0 : index
    %c0_5 = arith.constant 0 : index
    %7 = vector.load %arg3[%c0_4, %c0_5] : memref<16x128xf32, #tpu.memory_space<vmem>>, vector<16x128xf32>
    tpu.vector_store %arg3[%c0_4, %c0_5], %6 {strides = array<i32>} : memref<16x128xf32, #tpu.memory_space<vmem>>, vector<16x128xf32>,
    return
  }
  func.func @transform_0(%arg0: i32) -> (i32, i32) {
    %c0_i32 = arith.constant 0 : i32
    %c0_i32_0 = arith.constant 0 : i32
    return %arg0, %c0_i32 : i32, i32
  }
  func.func @transform_1(%arg0: i32) -> (i32, i32) {
    %c0_i32 = arith.constant 0 : i32
    %c0_i32_0 = arith.constant 0 : i32
    return %arg0, %c0_i32 : i32, i32
  }
  func.func @transform_2(%arg0: i32) -> (i32, i32) {
    %c0_i32 = arith.constant 0 : i32
    %c0_i32_0 = arith.constant 0 : i32
    return %arg0, %c0_i32 : i32, i32
  }
}

</mosaic_0001>

<llo_original>
// kernel: tpu_custom_call.1
$region0: #{tpu_custom_call.1}
  #allocation0 [shape = 'u32[]', space=smem, size = 0x4, offset = 0x4, fixed_abs, tag = 'smem constant byte address 0x4 - core index']
  #allocation1 [shape = 'u32[144,128]{1,0:T(1,128)}', space=vmem, size = 0x12000, scoped, tag = 'internal scratch']
  %s0 = inlined_call_operand.hbm [shape: f32[16,128], index: 0, kind: input, shape index: {}]
  %s1 = inlined_call_operand.hbm [shape: f32[16,128], index: 1, kind: input, shape index: {}]
  %s2 = inlined_call_operand.hbm [shape: f32[16,128], index: 2, kind: output, shape index: {}]
  %s3 = sld [smem:[#allocation0]]
  $region26: #{tpu_custom_call.1} parent=0
    _
  %s5 = ssub.s32 1, %s3
  %s6 = scalar_select 0, %s5, %s3
  $region1: #{tpu_custom_call.1} parent=0
    #allocation2 [shape = 'u8[8192]{0}', space=vmem, size = 0x2000, scoped, tag = 'input window, operand 0, single buffered']
    #allocation3 [shape = 's32[1]{0}', space=sflag, size = 0x4, scoped, tag = 'scoped memory for tpu_custom_call.1']
    #allocation4 [shape = 's32[1]{0}', space=sflag, size = 0x4, scoped, tag = 'scoped memory for tpu_custom_call.1']
    #allocation5 [shape = 'u8[8192]{0}', space=vmem, size = 0x2000, scoped, tag = 'input window, operand 1, single buffered']
    #allocation6 [shape = 's32[1]{0}', space=sflag, size = 0x4, scoped, tag = 'scoped memory for tpu_custom_call.1']
    #allocation7 [shape = 'u8[8192]{0}', space=vmem, size = 0x2000, scoped, tag = 'output window, operand 0, single buffered']
    %7 = vsyncpa [#allocation3], 0
    %8 = vsyncpa [#allocation6], 0
    %9 = vsyncpa [#allocation4], 0
    // Predicated region
    $region2: #{tpu_custom_call.1} parent=1 // pred_check
      _
    $region3: #{tpu_custom_call.1} parent=1 // pred_check_branch
      %11 = sbr.rel (0) target = $region5
    $region4: #{tpu_custom_call.1} parent=1 // pred_region
      %s13 = ssub.s32 256, 256
      %14 = vsyncadd [#allocation3], %s13
      %s15 = sshll.u32 [#allocation2], 4
      %s16 = int_to_ptr.vmem [resolvable:$true] %s15
      %21 = dma.hbm_to_vmem [thread:$0]  %s0, 256, %s16, [#allocation3], 128, 128, 8
    $region5: #{tpu_custom_call.1} parent=1 // pred_fallthru
      _
    // Predicated region
    $region6: #{tpu_custom_call.1} parent=1 // pred_check
      _
    $region7: #{tpu_custom_call.1} parent=1 // pred_check_branch
      %23 = sbr.rel (0) target = $region9
    $region8: #{tpu_custom_call.1} parent=1 // pred_region
      %s25 = ssub.s32 256, 256
      %26 = vsyncadd [#allocation6], %s25
      %s27 = sshll.u32 [#allocation5], 4
      %s28 = int_to_ptr.vmem [resolvable:$true] %s27
      %33 = dma.hbm_to_vmem [thread:$0]  %s1, 256, %s28, [#allocation6], 128, 128, 8
    $region9: #{tpu_custom_call.1} parent=1 // pred_fallthru
      _
    // Predicated region
    $region10: #{tpu_custom_call.1} parent=1 // pred_check
      _
    $region11: #{tpu_custom_call.1} parent=1 // pred_check_branch
      %35 = sbr.rel (0) target = $region13
    $region12: #{tpu_custom_call.1} parent=1 // pred_region
      %36 = dma.done [#allocation3], 256
    $region13: #{tpu_custom_call.1} parent=1 // pred_fallthru
      _
    // Predicated region
    $region14: #{tpu_custom_call.1} parent=1 // pred_check
      _
    $region15: #{tpu_custom_call.1} parent=1 // pred_check_branch
      %38 = sbr.rel (0) target = $region17
    $region16: #{tpu_custom_call.1} parent=1 // pred_region
      %39 = dma.done [#allocation6], 256
    $region17: #{tpu_custom_call.1} parent=1 // pred_fallthru
      _
    %v40 = vld [vmem:[#allocation5] sm:$0xff]
    %v41 = vld [vmem:[#allocation5 + $0x8] sm:$0xff]
    %v42 = vmul.f32 %v40, 0.42857143
    %v43 = vmul.f32 %v41, 0.42857143
    %v44 = vadd.f32 %v42, 1.0
    %v45 = vadd.f32 %v43, 1.0
    %v46 = vld [vmem:[#allocation2] sm:$0xff]
    %v47 = vld [vmem:[#allocation2 + $0x8] sm:$0xff]
    %v48 = vmul.f32 %v46, %v44
    %v49 = vmul.f32 %v47, %v45
    %50 = vst [vmem:[#allocation7] sm:$0xff] %v48
    %51 = vst [vmem:[#allocation7 + $0x8] sm:$0xff] %v49
    // Predicated region
    $region18: #{tpu_custom_call.1} parent=1 // pred_check
      _
    $region19: #{tpu_custom_call.1} parent=1 // pred_check_branch
      %53 = sbr.rel (0) target = $region21
    $region20: #{tpu_custom_call.1} parent=1 // pred_region
      %s55 = ssub.s32 256, 256
      %56 = vsyncadd [#allocation4], %s55
      %s57 = sshll.u32 [#allocation7], 4
      %s58 = int_to_ptr.vmem [resolvable:$true] %s57
      %63 = dma.vmem_to_hbm [thread:$0]  %s58, 256, %s2, [#allocation4], 128, 128, 8
    $region21: #{tpu_custom_call.1} parent=1 // pred_fallthru
      _
    // Predicated region
    $region22: #{tpu_custom_call.1} parent=1 // pred_check
      _
    $region23: #{tpu_custom_call.1} parent=1 // pred_check_branch
      %65 = sbr.rel (0) target = $region25
    $region24: #{tpu_custom_call.1} parent=1 // pred_region
      %66 = dma.done [#allocation4], 256
    $region25: #{tpu_custom_call.1} parent=1 // pred_fallthru
      _
    %67 = vsyncpa [#allocation3], 1
    %68 = vsyncpa [#allocation6], 1
    %69 = vsyncpa [#allocation4], 1

</llo_original>
